<compile_context>
chip_gen: v7x
topology: tpu7x:2x2x1
jax: 0.10.0
libtpu: 0.0.40
codegen_flags: <defaults>
</compile_context>

<pallas_src>
import functools
import math

import jax
import jax.numpy as jnp
from jax.experimental import pallas as pl
from jax.experimental.pallas import tpu as pltpu

EPS = 1e-5
LANE = 128


def _round_up(x, m):
    return (x + m - 1) // m * m


# ---------------------------------------------------------------------------
# Fully fused kernel
# ---------------------------------------------------------------------------
def _prelu(x, a):
    return jnp.where(x > 0, x, a * x)


def _linear_bn(h, w_ref, b_ref):
    """Linear -> BatchNorm1d(affine=False, batch stats)."""
    y = jnp.dot(h, w_ref[...], preferred_element_type=jnp.float32) + b_ref[...]
    mean = jnp.mean(y, axis=0, keepdims=True)          # per-feature batch mean
    ctr = y - mean
    var = jnp.mean(ctr * ctr, axis=0, keepdims=True)   # biased variance (torch BN)
    return ctr * jax.lax.rsqrt(var + EPS)               # rsqrt once per feature (EUP)


def _fused_mlp_kernel(*refs, n_hidden):
    # refs: alphas(SMEM), x, w0, b0, ..., w_{nh-1}, b_{nh-1}, w_final, b_final, out
    alphas_ref = refs[0]            # SMEM f32[(n_hidden + 1,)]
    x_ref = refs[1]                 # VMEM (N, H_in)
    o_ref = refs[-1]                # VMEM (N, O_pad)   lane-dense
    wb = refs[2:-1]

    # task_mlp[0]: PReLU ; task_mlp[1]: Dropout (eval identity)
    h = _prelu(x_ref[...], alphas_ref[0])

    # NormedLinear blocks (unrolled; n_hidden is a Python int)
    for l in range(n_hidden):
        y = _linear_bn(h, wb[2 * l], wb[2 * l + 1])
        h = _prelu(y, alphas_ref[l + 1])                # Dropout: eval identity

    # final: Linear -> BatchNorm1d(affine=False, track_running_stats=False)
    o_ref[...] = _linear_bn(h, wb[2 * n_hidden], wb[2 * n_hidden + 1]).astype(o_ref.dtype)


# ---------------------------------------------------------------------------
# Parameter init (deterministic, mirrors nn.Linear default bounds; PReLU a=0.25)
# ---------------------------------------------------------------------------
def init_params(key, hidden_dim, out_dim, n_task_layers):
    keys = jax.random.split(key, 2 * n_task_layers)
    params = {"alpha0": jnp.float32(0.25), "layers": []}
    bound = 1.0 / math.sqrt(hidden_dim)
    for l in range(n_task_layers - 1):
        kw, kb = keys[2 * l], keys[2 * l + 1]
        params["layers"].append(
            {
                "w": jax.random.uniform(kw, (hidden_dim, hidden_dim), jnp.float32, -bound, bound),
                "b": jax.random.uniform(kb, (hidden_dim,), jnp.float32, -bound, bound),
                "alpha": jnp.float32(0.25),
            }
        )
    kw, kb = keys[-2], keys[-1]
    params["final"] = {
        "w": jax.random.uniform(kw, (hidden_dim, out_dim), jnp.float32, -bound, bound),
        "b": jax.random.uniform(kb, (out_dim,), jnp.float32, -bound, bound),
    }
    return params


# ---------------------------------------------------------------------------
# One-time packing: cast to f32, pad feature (lane) dims up to 128, stack alphas
# ---------------------------------------------------------------------------
def _pad_wb(w, b, pad_in):
    in_d, out_d = w.shape
    in_p = _round_up(in_d, LANE) if pad_in else in_d
    out_p = _round_up(out_d, LANE)
    wp = jnp.zeros((in_p, out_p), jnp.float32).at[:in_d, :out_d].set(w.astype(jnp.float32))
    bp = jnp.zeros((1, out_p), jnp.float32).at[0, :out_d].set(b.astype(jnp.float32))
    return wp, bp


def pack_params(params):
    hidden = params["layers"]
    alphas = jnp.asarray(
        [params["alpha0"]] + [l["alpha"] for l in hidden], dtype=jnp.float32
    )
    weights, biases = [], []
    for i, l in enumerate(hidden):
        wp, bp = _pad_wb(l["w"], l["b"], pad_in=(i > 0))   # first layer keeps x's raw width
        weights.append(wp)
        biases.append(bp)
    wf, bf = _pad_wb(params["final"]["w"], params["final"]["b"], pad_in=bool(hidden))
    weights.append(wf)
    biases.append(bf)
    return {
        "alphas": alphas,
        "weights": tuple(weights),
        "biases": tuple(biases),
        "n_hidden": len(hidden),
        "out_dim": int(params["final"]["w"].shape[1]),
    }


# ---------------------------------------------------------------------------
# Forward pass: one pallas_call for the whole network
# ---------------------------------------------------------------------------
def downstream_projection(packed, x):
    n = x.shape[0]
    x = x.astype(jnp.float32)
    n_hidden = packed["n_hidden"]
    out_dim = packed["out_dim"]
    o_pad = packed["weights"][-1].shape[1]

    kernel = functools.partial(_fused_mlp_kernel, n_hidden=n_hidden)

    in_specs = [
        pl.BlockSpec(memory_space=pltpu.MemorySpace.SMEM),   # alphas: scalars in SMEM
        pl.BlockSpec(x.shape, lambda i: (0, 0)),             # x: full block in VMEM
    ]
    inputs = [packed["alphas"], x]
    for w, b in zip(packed["weights"], packed["biases"]):
        in_specs.append(pl.BlockSpec(w.shape, lambda i: (0, 0)))
        in_specs.append(pl.BlockSpec(b.shape, lambda i: (0, 0)))
        inputs.extend([w, b])

    out = pl.pallas_call(
        kernel,
        out_shape=jax.ShapeDtypeStruct((n, o_pad), jnp.float32),
        grid=(1,),
        in_specs=in_specs,
        out_specs=pl.BlockSpec((n, o_pad), lambda i: (0, 0)),
        compiler_params=pltpu.CompilerParams(dimension_semantics=("arbitrary",)),
    )(*inputs)
    return out[:, :out_dim]                                  # drop lane padding


# ---------------------------------------------------------------------------
# Pure-JAX reference for correctness check
# ---------------------------------------------------------------------------
def _ref_prelu(x, a):
    return jnp.maximum(x, 0.0) + a * jnp.minimum(x, 0.0)


def _ref_forward(params, x):
    x = _ref_prelu(x, params["alpha0"])
    for layer in params["layers"]:
        y = x @ layer["w"] + layer["b"]
        m = y.mean(0, keepdims=True)
        v = ((y - m) ** 2).mean(0, keepdims=True)
        y = (y - m) / jnp.sqrt(v + EPS)
        x = _ref_prelu(y, layer["alpha"])
    y = x @ params["final"]["w"] + params["final"]["b"]
    m = y.mean(0, keepdims=True)
    v = ((y - m) ** 2).mean(0, keepdims=True)
    return (y - m) / jnp.sqrt(v + EPS)


if __name__ == "__main__":
    batch, hidden_dim, out_dim = 8, 32, 16
    n_task_layers = 3
    dropout = 0.1  # eval-mode identity

    key = jax.random.PRNGKey(0)
    k_x, k_p = jax.random.split(key)
    x = jax.random.normal(k_x, (batch, hidden_dim), jnp.float32)
    params = init_params(k_p, hidden_dim, out_dim, n_task_layers)
    packed = pack_params(params)

    out = downstream_projection(packed, x)
    out = jax.block_until_ready(out)

    ref = _ref_forward(params, x)
    assert out.shape == (batch, out_dim)
    assert jnp.allclose(out, ref, atol=1e-4, rtol=1e-4), "mismatch vs reference"

    print("KERNEL_OK")
</pallas_src>

<mosaic_0001>
module attributes {stable_mosaic.version = 11 : i64} {
  func.func @_fused_mlp_kernel(%arg0: i32, %arg1: memref<3xf32, #tpu.memory_space<smem>>, %arg2: memref<8x32xf32, #tpu.memory_space<vmem>>, %arg3: memref<32x128xf32, #tpu.memory_space<vmem>>, %arg4: memref<1x128xf32, #tpu.memory_space<vmem>>, %arg5: memref<128x128xf32, #tpu.memory_space<vmem>>, %arg6: memref<1x128xf32, #tpu.memory_space<vmem>>, %arg7: memref<128x128xf32, #tpu.memory_space<vmem>>, %arg8: memref<1x128xf32, #tpu.memory_space<vmem>>, %arg9: memref<8x128xf32, #tpu.memory_space<vmem>>) attributes {dimension_semantics = [#tpu.dimension_semantics<arbitrary>], iteration_bounds = array<i64: 1>, scalar_prefetch = 0 : i64, scratch_operands = 0 : i64, tpu.core_type = #tpu.core_type<tc>, window_params = [{transform_indices = @transform_0, window_bounds = array<i64: 3>}, {pipeline_mode = #tpu.pipeline_mode<synchronous>, transform_indices = @transform_1, window_bounds = array<i64: 8, 32>}, {pipeline_mode = #tpu.pipeline_mode<synchronous>, transform_indices = @transform_2, window_bounds = array<i64: 32, 128>}, {pipeline_mode = #tpu.pipeline_mode<synchronous>, transform_indices = @transform_3, window_bounds = array<i64: 1, 128>}, {pipeline_mode = #tpu.pipeline_mode<synchronous>, transform_indices = @transform_4, window_bounds = array<i64: 128, 128>}, {pipeline_mode = #tpu.pipeline_mode<synchronous>, transform_indices = @transform_5, window_bounds = array<i64: 1, 128>}, {pipeline_mode = #tpu.pipeline_mode<synchronous>, transform_indices = @transform_6, window_bounds = array<i64: 128, 128>}, {pipeline_mode = #tpu.pipeline_mode<synchronous>, transform_indices = @transform_7, window_bounds = array<i64: 1, 128>}, {pipeline_mode = #tpu.pipeline_mode<synchronous>, transform_indices = @transform_8, window_bounds = array<i64: 8, 128>}]} {
    %c0 = arith.constant 0 : index
    %c0_0 = arith.constant 0 : index
    %0 = vector.load %arg2[%c0, %c0_0] : memref<8x32xf32, #tpu.memory_space<vmem>>, vector<8x32xf32>
    %c0_1 = arith.constant 0 : index
    %1 = memref.load %arg1[%c0_1] : memref<3xf32, #tpu.memory_space<smem>>
    %cst = arith.constant 0.000000e+00 : f32
    %2 = vector.broadcast %cst : f32 to vector<8x32xf32>
    %3 = arith.cmpf ogt, %0, %2 : vector<8x32xf32>
    %4 = vector.broadcast %1 : f32 to vector<8x32xf32>
    %5 = arith.mulf %4, %0 : vector<8x32xf32>
    %6 = arith.select %3, %0, %5 : vector<8x32xi1>, vector<8x32xf32>
    %c0_2 = arith.constant 0 : index
    %c0_3 = arith.constant 0 : index
    %7 = vector.load %arg3[%c0_2, %c0_3] : memref<32x128xf32, #tpu.memory_space<vmem>>, vector<32x128xf32>
    %cst_4 = arith.constant dense<0.000000e+00> : vector<8x128xf32>
    %8 = tpu.matmul %6, %7, %cst_4 {dimension_numbers = #tpu.dot_dimension_numbers<[1], [0], [0], [1], [0, 0, 1, 1], [], []>} : vector<8x32xf32>, vector<32x128xf32>, vector<8x128xf32> -> vector<8x128xf32>
    %c0_5 = arith.constant 0 : index
    %c0_6 = arith.constant 0 : index
    %9 = vector.load %arg4[%c0_5, %c0_6] : memref<1x128xf32, #tpu.memory_space<vmem>>, vector<1x128xf32>
    %10 = vector.broadcast %9 : vector<1x128xf32> to vector<8x128xf32>
    %11 = arith.addf %8, %10 : vector<8x128xf32>
    %cst_7 = arith.constant dense<0.000000e+00> : vector<128xf32>
    %12 = vector.multi_reduction <add>, %11, %cst_7 [0] : vector<8x128xf32> to vector<128xf32>
    %13 = vector.shape_cast %12 : vector<128xf32> to vector<1x128xf32>
    %cst_8 = arith.constant 8.000000e+00 : f32
    %14 = vector.broadcast %cst_8 : f32 to vector<1x128xf32>
    %15 = arith.divf %13, %14 : vector<1x128xf32>
    %16 = vector.broadcast %15 : vector<1x128xf32> to vector<8x128xf32>
    %17 = arith.subf %11, %16 : vector<8x128xf32>
    %18 = arith.mulf %17, %17 : vector<8x128xf32>
    %cst_9 = arith.constant dense<0.000000e+00> : vector<128xf32>
    %19 = vector.multi_reduction <add>, %18, %cst_9 [0] : vector<8x128xf32> to vector<128xf32>
    %20 = vector.shape_cast %19 : vector<128xf32> to vector<1x128xf32>
    %cst_10 = arith.constant 8.000000e+00 : f32
    %21 = vector.broadcast %cst_10 : f32 to vector<1x128xf32>
    %22 = arith.divf %20, %21 : vector<1x128xf32>
    %cst_11 = arith.constant 9.99999974E-6 : f32
    %23 = vector.broadcast %cst_11 : f32 to vector<1x128xf32>
    %24 = arith.addf %22, %23 : vector<1x128xf32>
    %25 = math.rsqrt %24 : vector<1x128xf32>
    %26 = vector.broadcast %25 : vector<1x128xf32> to vector<8x128xf32>
    %27 = arith.mulf %17, %26 : vector<8x128xf32>
    %c1 = arith.constant 1 : index
    %28 = memref.load %arg1[%c1] : memref<3xf32, #tpu.memory_space<smem>>
    %cst_12 = arith.constant 0.000000e+00 : f32
    %29 = vector.broadcast %cst_12 : f32 to vector<8x128xf32>
    %30 = arith.cmpf ogt, %27, %29 : vector<8x128xf32>
    %31 = vector.broadcast %28 : f32 to vector<8x128xf32>
    %32 = arith.mulf %31, %27 : vector<8x128xf32>
    %33 = arith.select %30, %27, %32 : vector<8x128xi1>, vector<8x128xf32>
    %c0_13 = arith.constant 0 : index
    %c0_14 = arith.constant 0 : index
    %34 = vector.load %arg5[%c0_13, %c0_14] : memref<128x128xf32, #tpu.memory_space<vmem>>, vector<128x128xf32>
    %cst_15 = arith.constant dense<0.000000e+00> : vector<8x128xf32>
    %35 = tpu.matmul %33, %34, %cst_15 {dimension_numbers = #tpu.dot_dimension_numbers<[1], [0], [0], [1], [0, 0, 1, 1], [], []>} : vector<8x128xf32>, vector<128x128xf32>, vector<8x128xf32> -> vector<8x128xf32>
    %c0_16 = arith.constant 0 : index
    %c0_17 = arith.constant 0 : index
    %36 = vector.load %arg6[%c0_16, %c0_17] : memref<1x128xf32, #tpu.memory_space<vmem>>, vector<1x128xf32>
    %37 = vector.broadcast %36 : vector<1x128xf32> to vector<8x128xf32>
    %38 = arith.addf %35, %37 : vector<8x128xf32>
    %cst_18 = arith.constant dense<0.000000e+00> : vector<128xf32>
    %39 = vector.multi_reduction <add>, %38, %cst_18 [0] : vector<8x128xf32> to vector<128xf32>
    %40 = vector.shape_cast %39 : vector<128xf32> to vector<1x128xf32>
    %cst_19 = arith.constant 8.000000e+00 : f32
    %41 = vector.broadcast %cst_19 : f32 to vector<1x128xf32>
    %42 = arith.divf %40, %41 : vector<1x128xf32>
    %43 = vector.broadcast %42 : vector<1x128xf32> to vector<8x128xf32>
    %44 = arith.subf %38, %43 : vector<8x128xf32>
    %45 = arith.mulf %44, %44 : vector<8x128xf32>
    %cst_20 = arith.constant dense<0.000000e+00> : vector<128xf32>
    %46 = vector.multi_reduction <add>, %45, %cst_20 [0] : vector<8x128xf32> to vector<128xf32>
    %47 = vector.shape_cast %46 : vector<128xf32> to vector<1x128xf32>
    %cst_21 = arith.constant 8.000000e+00 : f32
    %48 = vector.broadcast %cst_21 : f32 to vector<1x128xf32>
    %49 = arith.divf %47, %48 : vector<1x128xf32>
    %cst_22 = arith.constant 9.99999974E-6 : f32
    %50 = vector.broadcast %cst_22 : f32 to vector<1x128xf32>
    %51 = arith.addf %49, %50 : vector<1x128xf32>
    %52 = math.rsqrt %51 : vector<1x128xf32>
    %53 = vector.broadcast %52 : vector<1x128xf32> to vector<8x128xf32>
    %54 = arith.mulf %44, %53 : vector<8x128xf32>
    %c2 = arith.constant 2 : index
    %55 = memref.load %arg1[%c2] : memref<3xf32, #tpu.memory_space<smem>>
    %cst_23 = arith.constant 0.000000e+00 : f32
    %56 = vector.broadcast %cst_23 : f32 to vector<8x128xf32>
    %57 = arith.cmpf ogt, %54, %56 : vector<8x128xf32>
    %58 = vector.broadcast %55 : f32 to vector<8x128xf32>
    %59 = arith.mulf %58, %54 : vector<8x128xf32>
    %60 = arith.select %57, %54, %59 : vector<8x128xi1>, vector<8x128xf32>
    %c0_24 = arith.constant 0 : index
    %c0_25 = arith.constant 0 : index
    %61 = vector.load %arg7[%c0_24, %c0_25] : memref<128x128xf32, #tpu.memory_space<vmem>>, vector<128x128xf32>
    %cst_26 = arith.constant dense<0.000000e+00> : vector<8x128xf32>
    %62 = tpu.matmul %60, %61, %cst_26 {dimension_numbers = #tpu.dot_dimension_numbers<[1], [0], [0], [1], [0, 0, 1, 1], [], []>} : vector<8x128xf32>, vector<128x128xf32>, vector<8x128xf32> -> vector<8x128xf32>
    %c0_27 = arith.constant 0 : index
    %c0_28 = arith.constant 0 : index
    %63 = vector.load %arg8[%c0_27, %c0_28] : memref<1x128xf32, #tpu.memory_space<vmem>>, vector<1x128xf32>
    %64 = vector.broadcast %63 : vector<1x128xf32> to vector<8x128xf32>
    %65 = arith.addf %62, %64 : vector<8x128xf32>
    %cst_29 = arith.constant dense<0.000000e+00> : vector<128xf32>
    %66 = vector.multi_reduction <add>, %65, %cst_29 [0] : vector<8x128xf32> to vector<128xf32>
    %67 = vector.shape_cast %66 : vector<128xf32> to vector<1x128xf32>
    %cst_30 = arith.constant 8.000000e+00 : f32
    %68 = vector.broadcast %cst_30 : f32 to vector<1x128xf32>
    %69 = arith.divf %67, %68 : vector<1x128xf32>
    %70 = vector.broadcast %69 : vector<1x128xf32> to vector<8x128xf32>
    %71 = arith.subf %65, %70 : vector<8x128xf32>
    %72 = arith.mulf %71, %71 : vector<8x128xf32>
    %cst_31 = arith.constant dense<0.000000e+00> : vector<128xf32>
    %73 = vector.multi_reduction <add>, %72, %cst_31 [0] : vector<8x128xf32> to vector<128xf32>
    %74 = vector.shape_cast %73 : vector<128xf32> to vector<1x128xf32>
    %cst_32 = arith.constant 8.000000e+00 : f32
    %75 = vector.broadcast %cst_32 : f32 to vector<1x128xf32>
    %76 = arith.divf %74, %75 : vector<1x128xf32>
    %cst_33 = arith.constant 9.99999974E-6 : f32
    %77 = vector.broadcast %cst_33 : f32 to vector<1x128xf32>
    %78 = arith.addf %76, %77 : vector<1x128xf32>
    %79 = math.rsqrt %78 : vector<1x128xf32>
    %80 = vector.broadcast %79 : vector<1x128xf32> to vector<8x128xf32>
    %81 = arith.mulf %71, %80 : vector<8x128xf32>
    %c0_34 = arith.constant 0 : index
    %c0_35 = arith.constant 0 : index
    %82 = vector.load %arg9[%c0_34, %c0_35] : memref<8x128xf32, #tpu.memory_space<vmem>>, vector<8x128xf32>
    tpu.vector_store %arg9[%c0_34, %c0_35], %81 {strides = array<i32>} : memref<8x128xf32, #tpu.memory_space<vmem>>, vector<8x128xf32>,
    return
  }
  func.func @transform_0(%arg0: i32) -> i32 {
    %c0_i32 = arith.constant 0 : i32
    %c0_i32_0 = arith.constant 0 : i32
    return %c0_i32 : i32
  }
  func.func @transform_1(%arg0: i32) -> (i32, i32) {
    %c0_i32 = arith.constant 0 : i32
    %c0_i32_0 = arith.constant 0 : i32
    %c0_i32_1 = arith.constant 0 : i32
    return %c0_i32, %c0_i32_0 : i32, i32
  }
  func.func @transform_2(%arg0: i32) -> (i32, i32) {
    %c0_i32 = arith.constant 0 : i32
    %c0_i32_0 = arith.constant 0 : i32
    %c0_i32_1 = arith.constant 0 : i32
    return %c0_i32, %c0_i32_0 : i32, i32
  }
  func.func @transform_3(%arg0: i32) -> (i32, i32) {
    %c0_i32 = arith.constant 0 : i32
    %c0_i32_0 = arith.constant 0 : i32
    %c0_i32_1 = arith.constant 0 : i32
    return %c0_i32, %c0_i32_0 : i32, i32
  }
  func.func @transform_4(%arg0: i32) -> (i32, i32) {
    %c0_i32 = arith.constant 0 : i32
    %c0_i32_0 = arith.constant 0 : i32
    %c0_i32_1 = arith.constant 0 : i32
    return %c0_i32, %c0_i32_0 : i32, i32
  }
  func.func @transform_5(%arg0: i32) -> (i32, i32) {
    %c0_i32 = arith.constant 0 : i32
    %c0_i32_0 = arith.constant 0 : i32
    %c0_i32_1 = arith.constant 0 : i32
    return %c0_i32, %c0_i32_0 : i32, i32
  }
  func.func @transform_6(%arg0: i32) -> (i32, i32) {
    %c0_i32 = arith.constant 0 : i32
    %c0_i32_0 = arith.constant 0 : i32
    %c0_i32_1 = arith.constant 0 : i32
    return %c0_i32, %c0_i32_0 : i32, i32
  }
  func.func @transform_7(%arg0: i32) -> (i32, i32) {
    %c0_i32 = arith.constant 0 : i32
    %c0_i32_0 = arith.constant 0 : i32
    %c0_i32_1 = arith.constant 0 : i32
    return %c0_i32, %c0_i32_0 : i32, i32
  }
  func.func @transform_8(%arg0: i32) -> (i32, i32) {
    %c0_i32 = arith.constant 0 : i32
    %c0_i32_0 = arith.constant 0 : i32
    %c0_i32_1 = arith.constant 0 : i32
    return %c0_i32, %c0_i32_0 : i32, i32
  }
}

</mosaic_0001>

<llo_original>
// kernel: tpu_custom_call.1
$region0: #{tpu_custom_call.1}
  #allocation0 [shape = 'u32[]', space=smem, size = 0x4, offset = 0x4, fixed_abs, tag = 'smem constant byte address 0x4 - core index']
  #allocation1 [shape = 'u32[144,128]{1,0:T(1,128)}', space=vmem, size = 0x12000, scoped, tag = 'internal scratch']
  %s0 = inlined_call_operand.hbm [shape: f32[3], index: 0, kind: input, shape index: {}]
  %s1 = inlined_call_operand.hbm [shape: f32[8,32], index: 1, kind: input, shape index: {}]
  %s2 = inlined_call_operand.hbm [shape: f32[32,128], index: 2, kind: input, shape index: {}]
  %s3 = inlined_call_operand.vmem [shape: f32[1,128], index: 3, kind: input, shape index: {}]
  %s4 = inlined_call_operand.hbm [shape: f32[128,128], index: 4, kind: input, shape index: {}]
  %s5 = inlined_call_operand.vmem [shape: f32[1,128], index: 5, kind: input, shape index: {}]
  %s6 = inlined_call_operand.hbm [shape: f32[128,128], index: 6, kind: input, shape index: {}]
  %s7 = inlined_call_operand.vmem [shape: f32[1,128], index: 7, kind: input, shape index: {}]
  %s8 = inlined_call_operand.hbm [shape: f32[8,128], index: 8, kind: output, shape index: {}]
  %s9 = sld [smem:[#allocation0]]
  $region62: #{tpu_custom_call.1} parent=0
    _
  %s11 = ssub.s32 1, %s9
  %s12 = scalar_select 0, %s11, %s9
  $region1: #{tpu_custom_call.1} parent=0
    #allocation2 [shape = 'u8[512]{0}', space=smem, size = 0x200, scoped, tag = 'input window, operand 0, single buffered']
    #allocation3 [shape = 's32[1]{0}', space=sflag, size = 0x4, scoped, tag = 'scoped memory for tpu_custom_call.1']
    #allocation4 [shape = 's32[1]{0}', space=sflag, size = 0x4, scoped, tag = 'scoped memory for tpu_custom_call.1']
    #allocation5 [shape = 's32[1]{0}', space=sflag, size = 0x4, scoped, tag = 'scoped memory for tpu_custom_call.1']
    #allocation6 [shape = 'u8[4096]{0}', space=vmem, size = 0x1000, scoped, tag = 'input window, operand 1, single buffered']
    #allocation7 [shape = 'u8[16384]{0}', space=vmem, size = 0x4000, scoped, tag = 'input window, operand 2, single buffered']
    #allocation8 [shape = 's32[1]{0}', space=sflag, size = 0x4, scoped, tag = 'scoped memory for tpu_custom_call.1']
    #allocation9 [shape = 'u8[65536]{0}', space=vmem, size = 0x10000, scoped, tag = 'input window, operand 4, single buffered']
    #allocation10 [shape = 'u8[65536]{0}', space=vmem, size = 0x10000, scoped, tag = 'input window, operand 6, single buffered']
    #allocation11 [shape = 's32[1]{0}', space=sflag, size = 0x4, scoped, tag = 'scoped memory for tpu_custom_call.1']
    #allocation12 [shape = 'u8[4096]{0}', space=vmem, size = 0x1000, scoped, tag = 'output window, operand 0, single buffered']
    %13 = vsyncpa [#allocation5], 0
    %14 = vsyncpa [#allocation3], 0
    %15 = vsyncpa [#allocation8], 0
    %16 = vsyncpa [#allocation11], 0
    %17 = vsyncpa [#allocation4], 0
    // Predicated region
    $region2: #{tpu_custom_call.1} parent=1 // pred_check
      _
    $region3: #{tpu_custom_call.1} parent=1 // pred_check_branch
      %19 = sbr.rel (0) target = $region5
    $region4: #{tpu_custom_call.1} parent=1 // pred_region
      %s21 = ssub.s32 16, 16
      %22 = vsyncadd [#allocation5], %s21
      %25 = dma.hbm_to_smem %s0, 16, [#allocation2], [#allocation5]
    $region5: #{tpu_custom_call.1} parent=1 // pred_fallthru
      _
    // Predicated region
    $region6: #{tpu_custom_call.1} parent=1 // pred_check
      _
    $region7: #{tpu_custom_call.1} parent=1 // pred_check_branch
      %27 = sbr.rel (0) target = $region9
    $region8: #{tpu_custom_call.1} parent=1 // pred_region
      %s29 = ssub.s32 128, 128
      %30 = vsyncadd [#allocation3], %s29
      %s32 = sshll.u32 [#allocation6], 4
      %s33 = int_to_ptr.vmem [resolvable:$true] %s32
      %35 = dma.hbm_to_vmem [thread:$0]  %s1, 128, %s33, [#allocation3]
    $region9: #{tpu_custom_call.1} parent=1 // pred_fallthru
      _
    // Predicated region
    $region10: #{tpu_custom_call.1} parent=1 // pred_check
      _
    $region11: #{tpu_custom_call.1} parent=1 // pred_check_branch
      %37 = sbr.rel (0) target = $region13
    $region12: #{tpu_custom_call.1} parent=1 // pred_region
      %s39 = ssub.s32 512, 512
      %40 = vsyncadd [#allocation8], %s39
      %s41 = sshll.u32 [#allocation7], 4
      %s42 = int_to_ptr.vmem [resolvable:$true] %s41
      %47 = dma.hbm_to_vmem [thread:$0]  %s2, 512, %s42, [#allocation8], 128, 128, 8
    $region13: #{tpu_custom_call.1} parent=1 // pred_fallthru
      _
    // Predicated region
    $region14: #{tpu_custom_call.1} parent=1 // pred_check
      _
    $region15: #{tpu_custom_call.1} parent=1 // pred_check_branch
      %49 = sbr.rel (0) target = $region17
    $region16: #{tpu_custom_call.1} parent=1 // pred_region
      _
    $region17: #{tpu_custom_call.1} parent=1 // pred_fallthru
      _
    // Predicated region
    $region18: #{tpu_custom_call.1} parent=1 // pred_check
      _
    $region19: #{tpu_custom_call.1} parent=1 // pred_check_branch
      %51 = sbr.rel (0) target = $region21
    $region20: #{tpu_custom_call.1} parent=1 // pred_region
      %s53 = ssub.s32 2048, 2048
      %54 = vsyncadd [#allocation8], %s53
      %s55 = sshll.u32 [#allocation9], 4
      %s56 = int_to_ptr.vmem [resolvable:$true] %s55
      %61 = dma.hbm_to_vmem [thread:$0]  %s4, 2048, %s56, [#allocation8], 128, 128, 8
    $region21: #{tpu_custom_call.1} parent=1 // pred_fallthru
      _
    // Predicated region
    $region22: #{tpu_custom_call.1} parent=1 // pred_check
      _
    $region23: #{tpu_custom_call.1} parent=1 // pred_check_branch
      %63 = sbr.rel (0) target = $region25
    $region24: #{tpu_custom_call.1} parent=1 // pred_region
      _
    $region25: #{tpu_custom_call.1} parent=1 // pred_fallthru
      _
    // Predicated region
    $region26: #{tpu_custom_call.1} parent=1 // pred_check
      _
    $region27: #{tpu_custom_call.1} parent=1 // pred_check_branch
      %65 = sbr.rel (0) target = $region29
    $region28: #{tpu_custom_call.1} parent=1 // pred_region
      %s67 = ssub.s32 2048, 2048
      %68 = vsyncadd [#allocation11], %s67
      %s69 = sshll.u32 [#allocation10], 4
      %s70 = int_to_ptr.vmem [resolvable:$true] %s69
      %75 = dma.hbm_to_vmem [thread:$0]  %s6, 2048, %s70, [#allocation11], 128, 128, 8
    $region29: #{tpu_custom_call.1} parent=1 // pred_fallthru
      _
    // Predicated region
    $region30: #{tpu_custom_call.1} parent=1 // pred_check
      _
    $region31: #{tpu_custom_call.1} parent=1 // pred_check_branch
      %77 = sbr.rel (0) target = $region33
    $region32: #{tpu_custom_call.1} parent=1 // pred_region
      _
    $region33: #{tpu_custom_call.1} parent=1 // pred_fallthru
      _
    // Predicated region
    $region34: #{tpu_custom_call.1} parent=1 // pred_check
      _
    $region35: #{tpu_custom_call.1} parent=1 // pred_check_branch
      %79 = sbr.rel (0) target = $region37
    $region36: #{tpu_custom_call.1} parent=1 // pred_region
      %80 = dma.done [#allocation5], 16
    $region37: #{tpu_custom_call.1} parent=1 // pred_fallthru
      _
    // Predicated region
    $region38: #{tpu_custom_call.1} parent=1 // pred_check
      _
    $region39: #{tpu_custom_call.1} parent=1 // pred_check_branch
      %82 = sbr.rel (0) target = $region41
    $region40: #{tpu_custom_call.1} parent=1 // pred_region
      %83 = dma.done [#allocation3], 128
    $region41: #{tpu_custom_call.1} parent=1 // pred_fallthru
      _
    // Predicated region
    $region42: #{tpu_custom_call.1} parent=1 // pred_check
      _
    $region43: #{tpu_custom_call.1} parent=1 // pred_check_branch
      %85 = sbr.rel (0) target = $region45
    $region44: #{tpu_custom_call.1} parent=1 // pred_region
      %86 = dma.done [#allocation8], 512
    $region45: #{tpu_custom_call.1} parent=1 // pred_fallthru
      _
    // Predicated region
    $region46: #{tpu_custom_call.1} parent=1 // pred_check
      _
    $region47: #{tpu_custom_call.1} parent=1 // pred_check_branch
      %88 = sbr.rel (0) target = $region49
    $region48: #{tpu_custom_call.1} parent=1 // pred_region
      %89 = dma.done [#allocation8], 2048
    $region49: #{tpu_custom_call.1} parent=1 // pred_fallthru
      _
    // Predicated region
    $region50: #{tpu_custom_call.1} parent=1 // pred_check
      _
    $region51: #{tpu_custom_call.1} parent=1 // pred_check_branch
      %91 = sbr.rel (0) target = $region53
    $region52: #{tpu_custom_call.1} parent=1 // pred_region
      %92 = dma.done [#allocation11], 2048
    $region53: #{tpu_custom_call.1} parent=1 // pred_fallthru
      _
    %93 = sfence
    %v94 = vld [vmem:[#allocation6] sm:$0xff]
    %s95 = sld [smem:[#allocation2]]
    %vm96 = vcmp.gt.f32.partialorder %v94, 0.0
    %v97 = vstv %s95
    %v98 = vmul.f32 %v97, %v94
    %v99 = vsel %vm96, %v94, %v98
    %v100 = vld [vmem:[#allocation7] sm:$0xff]
    %v101 = vld [vmem:[#allocation7 + $0x8] sm:$0xff]
    %v102 = vld [vmem:[#allocation7 + $0x10] sm:$0xff]
    %v103 = vld [vmem:[#allocation7 + $0x18] sm:$0xff]
    %v104 = vld [vmem:[%s3] sm:$0x1]
    %v106 = vlaneseq
    %v107 = vshrl.u32 %v106, 7
    %v108 = vsub.s32 0, %v107
    %v109 = vrot.slane %v104, %v108
    %vm111 = vcmask 261120
    %v113 = vsel %vm111, %v99, 0
    %115 = vmatprep.subr.mxu0 0.0
    %116 = vmatpush1.msra.mxu0 %v100
    %117 = vmatprep.subr.mxu0 0.0
    %118 = vmatpush1.msra.mxu0 %v101
    %119 = vmatprep.subr.mxu0 0.0
    %120 = vmatpush1.msra.mxu0 %v102
    %121 = vmatprep.subr.mxu0 0.0
    %122 = vmatpush1.msra.mxu0 %v103
    %123 = vmatprep.subr.mxu0 0.0
    %124 = vmatpush1.msra.mxu0 0.0
    %125 = vmatprep.subr.mxu0 0.0
    %126 = vmatpush1.msra.mxu0 0.0
    %127 = vmatprep.subr.mxu0 0.0
    %128 = vmatpush1.msra.mxu0 0.0
    %129 = vmatprep.subr.mxu0 0.0
    %130 = vmatpush1.msra.mxu0 0.0
    %131 = vmatprep.subr.mxu0 0.0
    %132 = vmatpush1.msra.mxu0 0.0
    %133 = vmatprep.subr.mxu0 0.0
    %134 = vmatpush1.msra.mxu0 0.0
    %135 = vmatprep.subr.mxu0 0.0
    %136 = vmatpush1.msra.mxu0 0.0
    %137 = vmatprep.subr.mxu0 0.0
    %138 = vmatpush1.msra.mxu0 0.0
    %139 = vmatprep.subr.mxu0 0.0
    %140 = vmatpush1.msra.mxu0 0.0
    %141 = vmatprep.subr.mxu0 0.0
    %142 = vmatpush1.msra.mxu0 0.0
    %143 = vmatprep.subr.mxu0 0.0
    %144 = vmatpush1.msra.mxu0 0.0
    %145 = vmatprep.subr.mxu0 0.0
    %146 = vmatpush1.msra.mxu0 0.0
    %147 = vmatprep.subr.mxu0 0.0
    %148 = vmatpush1.msra.mxu0 0.0
    %149 = vmatprep.subr.mxu0 0.0
    %150 = vmatpush1.msra.mxu0 0.0
    %151 = vmatprep.subr.mxu0 0.0
    %152 = vmatpush1.msra.mxu0 0.0
    %153 = vmatprep.subr.mxu0 0.0
    %154 = vmatpush1.msra.mxu0 0.0
    %155 = vmatprep.subr.mxu0 0.0
    %156 = vmatpush1.msra.mxu0 0.0
    %157 = vmatprep.subr.mxu0 0.0
    %158 = vmatpush1.msra.mxu0 0.0
    %159 = vmatprep.subr.mxu0 0.0
    %160 = vmatpush1.msra.mxu0 0.0
    %161 = vmatprep.subr.mxu0 0.0
    %162 = vmatpush1.msra.mxu0 0.0
    %163 = vmatprep.subr.mxu0 0.0
    %164 = vmatpush1.msra.mxu0 0.0
    %165 = vmatprep.subr.mxu0 0.0
    %166 = vmatpush1.msra.mxu0 0.0
    %167 = vmatprep.subr.mxu0 0.0
    %168 = vmatpush1.msra.mxu0 0.0
    %169 = vmatprep.subr.mxu0 0.0
    %170 = vmatpush1.msra.mxu0 0.0
    %171 = vmatprep.subr.mxu0 0.0
    %172 = vmatpush1.msra.mxu0 0.0
    %173 = vmatprep.subr.mxu0 0.0
    %174 = vmatpush1.msra.mxu0 0.0
    %175 = vmatprep.subr.mxu0 0.0
    %176 = vmatpush1.msra.mxu0 0.0
    %177 = vmatprep.subr.mxu0 0.0
    %178 = vmatpush1.msra.mxu0 0.0
    %179 = vmatprep.mubr.f32.mxu0 0.0
    %180 = vmatmul.mubr.f32.gmra.mrb[0].mxu0 %v113
    %v181 = vpop.f32.mrb[0].mxu0
    %v182 = vadd.f32 %v109, %v181
    %v183 = vpop.f32.mrb[0].mxu0
    %184 = vdwg.mxu0
    %v185 = vrot.slane %v182, 4
    %v186 = vadd.f32 %v182, %v185
    %v187 = vrot.slane %v186, 2
    %v188 = vadd.f32 %v186, %v187
    %v189 = vrot.slane %v188, 1
    %v190 = vadd.f32 %v188, %v189
    %v191 = vrcp.pop 8.0
    %v192 = vmul.f32 %v190, %v191
    %v193 = vsub.f32 %v182, %v192
    %v194 = vmul.f32 %v193, %v193
    %v195 = vrot.slane %v194, 4
    %v196 = vadd.f32 %v194, %v195
    %v197 = vrot.slane %v196, 2
    %v198 = vadd.f32 %v196, %v197
    %v199 = vrot.slane %v198, 1
    %v200 = vadd.f32 %v198, %v199
    %v201 = vmul.f32 %v200, %v191
    %v202 = vadd.f32 %v201, 1e-05
    %v203 = vrsqrt.pop %v202
    %v204 = vmul.f32 %v193, %v203
    %s205 = sld [smem:[#allocation2 + $0x1]]
    %vm206 = vcmp.gt.f32.partialorder %v204, 0.0
    %v207 = vstv %s205
    %v208 = vmul.f32 %v207, %v204
    %v209 = vsel %vm206, %v204, %v208
    %v210 = vld [vmem:[#allocation9] sm:$0xff]
    %v211 = vld [vmem:[#allocation9 + $0x8] sm:$0xff]
    %v212 = vld [vmem:[#allocation9 + $0x10] sm:$0xff]
    %v213 = vld [vmem:[#allocation9 + $0x18] sm:$0xff]
    %v214 = vld [vmem:[#allocation9 + $0x20] sm:$0xff]
    %v215 = vld [vmem:[#allocation9 + $0x28] sm:$0xff]
    %v216 = vld [vmem:[#allocation9 + $0x30] sm:$0xff]
    %v217 = vld [vmem:[#allocation9 + $0x38] sm:$0xff]
    %v218 = vld [vmem:[#allocation9 + $0x40] sm:$0xff]
    %v219 = vld [vmem:[#allocation9 + $0x48] sm:$0xff]
    %v220 = vld [vmem:[#allocation9 + $0x50] sm:$0xff]
    %v221 = vld [vmem:[#allocation9 + $0x58] sm:$0xff]
    %v222 = vld [vmem:[#allocation9 + $0x60] sm:$0xff]
    %v223 = vld [vmem:[#allocation9 + $0x68] sm:$0xff]
    %v224 = vld [vmem:[#allocation9 + $0x70] sm:$0xff]
    %v225 = vld [vmem:[#allocation9 + $0x78] sm:$0xff]
    %v226 = vld [vmem:[%s5] sm:$0x1]
    %v228 = vlaneseq
    %v229 = vshrl.u32 %v228, 7
    %v230 = vsub.s32 0, %v229
    %v231 = vrot.slane %v226, %v230
    %233 = vmatprep.subr.mxu0 0.0
    %234 = vmatpush1.msra.mxu0 %v210
    %235 = vmatprep.subr.mxu0 0.0
    %236 = vmatpush1.msra.mxu0 %v211
    %237 = vmatprep.subr.mxu0 0.0
    %238 = vmatpush1.msra.mxu0 %v212
    %239 = vmatprep.subr.mxu0 0.0
    %240 = vmatpush1.msra.mxu0 %v213
    %241 = vmatprep.subr.mxu0 0.0
    %242 = vmatpush1.msra.mxu0 %v214
    %243 = vmatprep.subr.mxu0 0.0
    %244 = vmatpush1.msra.mxu0 %v215
    %245 = vmatprep.subr.mxu0 0.0
    %246 = vmatpush1.msra.mxu0 %v216
    %247 = vmatprep.subr.mxu0 0.0
    %248 = vmatpush1.msra.mxu0 %v217
    %249 = vmatprep.subr.mxu0 0.0
    %250 = vmatpush1.msra.mxu0 %v218
    %251 = vmatprep.subr.mxu0 0.0
    %252 = vmatpush1.msra.mxu0 %v219
    %253 = vmatprep.subr.mxu0 0.0
    %254 = vmatpush1.msra.mxu0 %v220
    %255 = vmatprep.subr.mxu0 0.0
    %256 = vmatpush1.msra.mxu0 %v221
    %257 = vmatprep.subr.mxu0 0.0
    %258 = vmatpush1.msra.mxu0 %v222
    %259 = vmatprep.subr.mxu0 0.0
    %260 = vmatpush1.msra.mxu0 %v223
    %261 = vmatprep.subr.mxu0 0.0
    %262 = vmatpush1.msra.mxu0 %v224
    %263 = vmatprep.subr.mxu0 0.0
    %264 = vmatpush1.msra.mxu0 %v225
    %265 = vmatprep.subr.mxu0 0.0
    %266 = vmatpush1.msra.mxu0 0.0
    %267 = vmatprep.subr.mxu0 0.0
    %268 = vmatpush1.msra.mxu0 0.0
    %269 = vmatprep.subr.mxu0 0.0
    %270 = vmatpush1.msra.mxu0 0.0
    %271 = vmatprep.subr.mxu0 0.0
    %272 = vmatpush1.msra.mxu0 0.0
    %273 = vmatprep.subr.mxu0 0.0
    %274 = vmatpush1.msra.mxu0 0.0
    %275 = vmatprep.subr.mxu0 0.0
    %276 = vmatpush1.msra.mxu0 0.0
    %277 = vmatprep.subr.mxu0 0.0
    %278 = vmatpush1.msra.mxu0 0.0
    %279 = vmatprep.subr.mxu0 0.0
    %280 = vmatpush1.msra.mxu0 0.0
    %281 = vmatprep.subr.mxu0 0.0
    %282 = vmatpush1.msra.mxu0 0.0
    %283 = vmatprep.subr.mxu0 0.0
    %284 = vmatpush1.msra.mxu0 0.0
    %285 = vmatprep.subr.mxu0 0.0
    %286 = vmatpush1.msra.mxu0 0.0
    %287 = vmatprep.subr.mxu0 0.0
    %288 = vmatpush1.msra.mxu0 0.0
    %289 = vmatprep.subr.mxu0 0.0
    %290 = vmatpush1.msra.mxu0 0.0
    %291 = vmatprep.subr.mxu0 0.0
    %292 = vmatpush1.msra.mxu0 0.0
    %293 = vmatprep.subr.mxu0 0.0
    %294 = vmatpush1.msra.mxu0 0.0
    %295 = vmatprep.subr.mxu0 0.0
    %296 = vmatpush1.msra.mxu0 0.0
    %297 = vmatprep.mubr.f32.mxu0 0.0
    %298 = vmatmul.mubr.f32.gmra.mrb[0].mxu0 %v209
    %v299 = vpop.f32.mrb[0].mxu0
    %v300 = vadd.f32 %v231, %v299
    %v301 = vpop.f32.mrb[0].mxu0
    %302 = vdwg.mxu0
    %v303 = vrot.slane %v300, 4
    %v304 = vadd.f32 %v300, %v303
    %v305 = vrot.slane %v304, 2
    %v306 = vadd.f32 %v304, %v305
    %v307 = vrot.slane %v306, 1
    %v308 = vadd.f32 %v306, %v307
    %v309 = vmul.f32 %v308, %v191
    %v310 = vsub.f32 %v300, %v309
    %v311 = vmul.f32 %v310, %v310
    %v312 = vrot.slane %v311, 4
    %v313 = vadd.f32 %v311, %v312
    %v314 = vrot.slane %v313, 2
    %v315 = vadd.f32 %v313, %v314
    %v316 = vrot.slane %v315, 1
    %v317 = vadd.f32 %v315, %v316
    %v318 = vmul.f32 %v317, %v191
    %v319 = vadd.f32 %v318, 1e-05
    %v320 = vrsqrt.pop %v319
    %v321 = vmul.f32 %v310, %v320
    %s322 = sld [smem:[#allocation2 + $0x2]]
    %vm323 = vcmp.gt.f32.partialorder %v321, 0.0
    %v324 = vstv %s322
    %v325 = vmul.f32 %v324, %v321
    %v326 = vsel %vm323, %v321, %v325
    %v327 = vld [vmem:[#allocation10] sm:$0xff]
    %v328 = vld [vmem:[#allocation10 + $0x8] sm:$0xff]
    %v329 = vld [vmem:[#allocation10 + $0x10] sm:$0xff]
    %v330 = vld [vmem:[#allocation10 + $0x18] sm:$0xff]
    %v331 = vld [vmem:[#allocation10 + $0x20] sm:$0xff]
    %v332 = vld [vmem:[#allocation10 + $0x28] sm:$0xff]
    %v333 = vld [vmem:[#allocation10 + $0x30] sm:$0xff]
    %v334 = vld [vmem:[#allocation10 + $0x38] sm:$0xff]
    %v335 = vld [vmem:[#allocation10 + $0x40] sm:$0xff]
    %v336 = vld [vmem:[#allocation10 + $0x48] sm:$0xff]
    %v337 = vld [vmem:[#allocation10 + $0x50] sm:$0xff]
    %v338 = vld [vmem:[#allocation10 + $0x58] sm:$0xff]
    %v339 = vld [vmem:[#allocation10 + $0x60] sm:$0xff]
    %v340 = vld [vmem:[#allocation10 + $0x68] sm:$0xff]
    %v341 = vld [vmem:[#allocation10 + $0x70] sm:$0xff]
    %v342 = vld [vmem:[#allocation10 + $0x78] sm:$0xff]
    %v343 = vld [vmem:[%s7] sm:$0x1]
    %v345 = vlaneseq
    %v346 = vshrl.u32 %v345, 7
    %v347 = vsub.s32 0, %v346
    %v348 = vrot.slane %v343, %v347
    %350 = vmatprep.subr.mxu0 0.0
    %351 = vmatpush1.msra.mxu0 %v327
    %352 = vmatprep.subr.mxu0 0.0
    %353 = vmatpush1.msra.mxu0 %v328
    %354 = vmatprep.subr.mxu0 0.0
    %355 = vmatpush1.msra.mxu0 %v329
    %356 = vmatprep.subr.mxu0 0.0
    %357 = vmatpush1.msra.mxu0 %v330
    %358 = vmatprep.subr.mxu0 0.0
    %359 = vmatpush1.msra.mxu0 %v331
    %360 = vmatprep.subr.mxu0 0.0
    %361 = vmatpush1.msra.mxu0 %v332
    %362 = vmatprep.subr.mxu0 0.0
    %363 = vmatpush1.msra.mxu0 %v333
    %364 = vmatprep.subr.mxu0 0.0
    %365 = vmatpush1.msra.mxu0 %v334
    %366 = vmatprep.subr.mxu0 0.0
    %367 = vmatpush1.msra.mxu0 %v335
    %368 = vmatprep.subr.mxu0 0.0
    %369 = vmatpush1.msra.mxu0 %v336
    %370 = vmatprep.subr.mxu0 0.0
    %371 = vmatpush1.msra.mxu0 %v337
    %372 = vmatprep.subr.mxu0 0.0
    %373 = vmatpush1.msra.mxu0 %v338
    %374 = vmatprep.subr.mxu0 0.0
    %375 = vmatpush1.msra.mxu0 %v339
    %376 = vmatprep.subr.mxu0 0.0
    %377 = vmatpush1.msra.mxu0 %v340
    %378 = vmatprep.subr.mxu0 0.0
    %379 = vmatpush1.msra.mxu0 %v341
    %380 = vmatprep.subr.mxu0 0.0
    %381 = vmatpush1.msra.mxu0 %v342
    %382 = vmatprep.subr.mxu0 0.0
    %383 = vmatpush1.msra.mxu0 0.0
    %384 = vmatprep.subr.mxu0 0.0
    %385 = vmatpush1.msra.mxu0 0.0
    %386 = vmatprep.subr.mxu0 0.0
    %387 = vmatpush1.msra.mxu0 0.0
    %388 = vmatprep.subr.mxu0 0.0
    %389 = vmatpush1.msra.mxu0 0.0
    %390 = vmatprep.subr.mxu0 0.0
    %391 = vmatpush1.msra.mxu0 0.0
    %392 = vmatprep.subr.mxu0 0.0
    %393 = vmatpush1.msra.mxu0 0.0
    %394 = vmatprep.subr.mxu0 0.0
    %395 = vmatpush1.msra.mxu0 0.0
    %396 = vmatprep.subr.mxu0 0.0
    %397 = vmatpush1.msra.mxu0 0.0
    %398 = vmatprep.subr.mxu0 0.0
    %399 = vmatpush1.msra.mxu0 0.0
    %400 = vmatprep.subr.mxu0 0.0
    %401 = vmatpush1.msra.mxu0 0.0
    %402 = vmatprep.subr.mxu0 0.0
    %403 = vmatpush1.msra.mxu0 0.0
    %404 = vmatprep.subr.mxu0 0.0
    %405 = vmatpush1.msra.mxu0 0.0
    %406 = vmatprep.subr.mxu0 0.0
    %407 = vmatpush1.msra.mxu0 0.0
    %408 = vmatprep.subr.mxu0 0.0
    %409 = vmatpush1.msra.mxu0 0.0
    %410 = vmatprep.subr.mxu0 0.0
    %411 = vmatpush1.msra.mxu0 0.0
    %412 = vmatprep.subr.mxu0 0.0
    %413 = vmatpush1.msra.mxu0 0.0
    %414 = vmatprep.mubr.f32.mxu0 0.0
    %415 = vmatmul.mubr.f32.gmra.mrb[0].mxu0 %v326
    %v416 = vpop.f32.mrb[0].mxu0
    %v417 = vadd.f32 %v348, %v416
    %v418 = vpop.f32.mrb[0].mxu0
    %419 = vdwg.mxu0
    %v420 = vrot.slane %v417, 4
    %v421 = vadd.f32 %v417, %v420
    %v422 = vrot.slane %v421, 2
    %v423 = vadd.f32 %v421, %v422
    %v424 = vrot.slane %v423, 1
    %v425 = vadd.f32 %v423, %v424
    %v426 = vmul.f32 %v425, %v191
    %v427 = vsub.f32 %v417, %v426
    %v428 = vmul.f32 %v427, %v427
    %v429 = vrot.slane %v428, 4
    %v430 = vadd.f32 %v428, %v429
    %v431 = vrot.slane %v430, 2
    %v432 = vadd.f32 %v430, %v431
    %v433 = vrot.slane %v432, 1
    %v434 = vadd.f32 %v432, %v433
    %v435 = vmul.f32 %v434, %v191
    %v436 = vadd.f32 %v435, 1e-05
    %v437 = vrsqrt.pop %v436
    %v438 = vmul.f32 %v427, %v437
    %439 = vst [vmem:[#allocation12] sm:$0xff] %v438
    // Predicated region
    $region54: #{tpu_custom_call.1} parent=1 // pred_check
      _
    $region55: #{tpu_custom_call.1} parent=1 // pred_check_branch
      %441 = sbr.rel (0) target = $region57
    $region56: #{tpu_custom_call.1} parent=1 // pred_region
      %s443 = ssub.s32 128, 128
      %444 = vsyncadd [#allocation4], %s443
      %s446 = sshll.u32 [#allocation12], 4
      %s447 = int_to_ptr.vmem [resolvable:$true] %s446
      %449 = dma.vmem_to_hbm [thread:$0]  %s447, 128, %s8, [#allocation4]
    $region57: #{tpu_custom_call.1} parent=1 // pred_fallthru
      _
    // Predicated region
    $region58: #{tpu_custom_call.1} parent=1 // pred_check
      _
    $region59: #{tpu_custom_call.1} parent=1 // pred_check_branch
      %451 = sbr.rel (0) target = $region61
    $region60: #{tpu_custom_call.1} parent=1 // pred_region
      %452 = dma.done [#allocation4], 128
    $region61: #{tpu_custom_call.1} parent=1 // pred_fallthru
      _
    %453 = vsyncpa [#allocation3], 1
    %454 = vsyncpa [#allocation8], 1
    %455 = vsyncpa [#allocation11], 1
    %456 = vsyncpa [#allocation4], 1
    %457 = vsyncpa [#allocation5], 1

</llo_original>
